<compile_context>
chip_gen: v7x
topology: tpu7x:2x2x1
jax: 0.10.0
libtpu: 0.0.40
codegen_flags: <defaults>
</compile_context>

<pallas_src>
import functools

import jax
import jax.numpy as jnp
from jax import lax
from jax.experimental import pallas as pl
from jax.experimental.pallas import tpu as pltpu


def _round_up(x, m):
    return ((x + m - 1) // m) * m


def _vmem_capacity_bytes():
    try:
        return int(pltpu.get_tpu_info().vmem_capacity_bytes)
    except Exception:  # non-TPU / interpret / older runtime: be conservative
        return 64 << 20


def _split_dot(x_f32, rhs_bf16, n_terms):
    """f32-accurate (M, K) @ (K, F) on the MXU via bf16 hi/lo splitting.

    rhs is {0,1}-valued (exact in bf16); each pass multiplies a bf16 operand
    exactly and accumulates in f32, so n_terms=3 recovers ~f32 accuracy
    independent of the backend's default f32 matmul precision.
    """
    acc = None
    res = x_f32
    for t in range(n_terms):
        hi = res.astype(jnp.bfloat16)
        part = jnp.dot(hi, rhs_bf16, preferred_element_type=jnp.float32)
        acc = part if acc is None else acc + part
        if t + 1 < n_terms:
            res = res - hi.astype(jnp.float32)
    return acc


# ---------------------------------------------------------------------------
# Folded kernel (num_bars divides 128): F = 128 // NB logical rows per lane-row
# ---------------------------------------------------------------------------
def _bar_loss_folded_kernel(logits_ref, idx_ref, const_ref, bexp_ref, bsum_ref,
                            out_ref, *, num_bars, smoothing):
    f32 = jnp.float32
    logits = logits_ref[...].astype(f32)          # (TM, 128)  F rows x NB bars
    idx = idx_ref[...]                            # (TM, F)    f32 ints, -1=nan
    consts = const_ref[...]                       # (3, 128)   f32
    bar_id = consts[0:1, :]                       # lane -> bar index
    log_bw = consts[1:2, :]                       # lane -> log(bucket_width)
    k_lane = consts[2:3, :]                       # smoothing*mean(log_bw)/NB
    bexp = bexp_ref[...]                          # (F, 128) bf16 {0,1}
    bsum = bsum_ref[...]                          # (128, F) bf16 {0,1}

    # Shared stability shift across the F folded rows (upper bound of every
    # segment max -> exp never overflows; see TODO on extreme spreads).
    m_row = jnp.max(logits, axis=-1, keepdims=True)            # (TM, 1)
    e = jnp.exp(logits - m_row)                                 # (TM, 128)

    # Per-logical-row softmax denominators on the MXU (f32-exact split).
    s_seg = _split_dot(e, bsum, 3)                              # (TM, F)

    # Expand the per-row bucket index to lanes (exact: small integers x {0,1}).
    idx_lane = jnp.dot(idx.astype(jnp.bfloat16), bexp,
                       preferred_element_type=f32)              # (TM, 128)
    onehot = idx_lane == bar_id                                 # (TM, 128)

    # Fused per-lane contribution:
    #   loss = lse_raw + (1-s)*(log_bw[i] - L[i]) + s*(mean_log_bw - mean(L))
    # lse_raw = m_row + log(s_seg); everything else is one segment-sum of q.
    q = ((1.0 - smoothing) * jnp.where(onehot, log_bw - logits, 0.0)
         - (smoothing / num_bars) * logits + k_lane)            # (TM, 128)
    q_seg = _split_dot(q, bsum, 3)                              # (TM, F)

    loss = m_row + jnp.log(s_seg) + q_seg                       # (TM, F)
    loss = jnp.where(idx < 0.0, 0.0, loss)                      # ignored (nan) targets
    out_ref[...] = loss.astype(out_ref.dtype)


# ---------------------------------------------------------------------------
# Fallback kernel: native (rows, NB) lane layout (NB does not divide 128)
# ---------------------------------------------------------------------------
def _bar_loss_flat_kernel(logits_ref, idx_ref, log_bw_ref, out_ref,
                          *, num_bars, smoothing):
    logits = logits_ref[...].astype(jnp.float32)   # (TM, NB)
    idx = idx_ref[...]                             # (TM, 1) f32 ints, -1 = nan
    log_bw = log_bw_ref[...]                       # (1, NB) f32

    m = jnp.max(logits, axis=-1, keepdims=True)
    z = logits - m
    lse = jnp.log(jnp.sum(jnp.exp(z), axis=-1, keepdims=True))   # (TM, 1)

    cols = lax.broadcasted_iota(jnp.int32, z.shape, 1).astype(jnp.float32)
    onehot = cols == idx
    gathered = jnp.sum(jnp.where(onehot, log_bw - z, 0.0),
                       axis=-1, keepdims=True)                   # (TM, 1)

    inv_nb = 1.0 / num_bars
    # (mean(log_bw) re-reduced per block; hoisted only on the folded path)
    mean_log_bw = jnp.sum(log_bw) * inv_nb
    mean_z = jnp.sum(z, axis=-1, keepdims=True) * inv_nb

    loss = (lse + (1.0 - smoothing) * gathered
            + smoothing * (mean_log_bw - mean_z))
    loss = jnp.where(idx < 0.0, 0.0, loss)
    # Lane-dense 1-D store of the per-row loss.
    out_ref[...] = jnp.reshape(loss, (loss.shape[0],))


# ---------------------------------------------------------------------------
# Tiling policy (generation aware)
# ---------------------------------------------------------------------------
def _pick_fold_tile(nf):
    cap = _vmem_capacity_bytes()
    if cap >= (100 << 20):            # v5e / v6e: 128 MiB VMEM per core
        tm, limit = 8192, 96 << 20    # ~4 MiB of f32 logits per block
    else:                             # v7x (64 MiB) or unknown: stay smaller
        tm, limit = 4096, 48 << 20    # ~2 MiB of f32 logits per block
    # Keep >=2 (>=4) grid blocks when there are enough rows so the "parallel"
    # axis can shard across TensorCores, without dropping below ~1 MiB blocks.
    if nf >= 8192:
        tm = min(tm, _round_up(-(-nf // 4), 8))
    elif nf >= 4096:
        tm = min(tm, _round_up(-(-nf // 2), 8))
    if nf <= tm:
        tm = nf
    return tm, limit


def _pick_flat_tile(num_bars, n_rows):
    cap = _vmem_capacity_bytes()
    if cap >= (100 << 20):
        budget, limit = 4 << 20, 96 << 20
    else:
        budget, limit = 2 << 20, 48 << 20
    lane_bytes = max(num_bars, 128) * 4        # f32 VMEM row incl. lane padding
    rt = budget // lane_bytes
    rt = max(128, (rt // 128) * 128)
    rt = min(rt, 8192)
    if n_rows <= rt:
        return n_rows, limit
    return rt, limit


# ---------------------------------------------------------------------------
# Wrapper
# ---------------------------------------------------------------------------
def bar_distribution_forward(logits, y, borders, *, smoothing=0.0,
                             training=True, row_tile=None):
    """Replicates BarDistribution.forward (mean_prediction_logits=None path)."""
    num_bars = int(borders.shape[0]) - 1
    assert logits.shape[-1] == num_bars
    lead_shape = logits.shape[:-1]
    n_rows = 1
    for d in lead_shape:
        n_rows *= int(d)

    eff_s = float(smoothing) if training else 0.0

    borders_f = borders.astype(jnp.float32)
    log_bw = jnp.log(borders_f[1:] - borders_f[:-1])            # (NB,)

    # --- tiny O(N) pre-pass: nan handling + bucket search (exact, in f32) ---
    y_flat = jnp.reshape(y, (-1,)).astype(jnp.float32)
    ignore = jnp.isnan(y_flat)
    y_s = jnp.where(ignore, borders_f[0], y_flat)
    idx = jnp.searchsorted(borders_f, y_s, side="left").astype(jnp.int32) - 1
    idx = jnp.where(y_s == borders_f[0], 0, idx)
    idx = jnp.where(y_s == borders_f[-1], num_bars - 1, idx)
    idx = jnp.clip(idx, 0, num_bars - 1)     # out-of-support -> edge bucket
    idx = jnp.where(ignore, -1, idx)         # -1 marks ignored (nan) targets
    idx_f = idx.astype(jnp.float32)

    logits2d = jnp.reshape(logits, (n_rows, num_bars))   # native dtype on wire
    in_itemsize = jnp.dtype(logits2d.dtype).itemsize

    foldable = (0 < num_bars < 128) and (128 % num_bars == 0)

    if foldable:
        fold = 128 // num_bars
        pad = (-n_rows) % fold
        if pad:
            logits2d = jnp.pad(logits2d, ((0, pad), (0, 0)))
            idx_f = jnp.pad(idx_f, ((0, pad),), constant_values=-1.0)
        nf = (n_rows + pad) // fold
        logits_fold = jnp.reshape(logits2d, (nf, 128))    # free (row-major)
        idx_fold = jnp.reshape(idx_f, (nf, fold))

        lane = jnp.arange(128, dtype=jnp.int32)
        bar_id = (lane % num_bars).astype(jnp.float32)
        group_id = lane // num_bars
        bexp = (group_id[None, :] ==
                jnp.arange(fold, dtype=jnp.int32)[:, None]).astype(jnp.bfloat16)
        bsum = jnp.transpose(bexp)                        # (128, fold)
        log_bw_lane = jnp.tile(log_bw, fold).astype(jnp.float32)
        k_val = (eff_s / num_bars) * jnp.mean(log_bw)
        k_lane = jnp.broadcast_to(k_val, (128,)).astype(jnp.float32)
        consts = jnp.stack([bar_id, log_bw_lane, k_lane], axis=0)   # (3, 128)

        tm_auto, vmem_limit = _pick_fold_tile(nf)
        if row_tile is None:
            tm = tm_auto
        else:
            tm = min(_round_up(max(int(row_tile), 8), 8), nf)
            if tm >= nf:
                tm = nf

        grid = (pl.cdiv(nf, tm),)
        kernel = functools.partial(_bar_loss_folded_kernel,
                                   num_bars=num_bars, smoothing=eff_s)
        cost = pl.CostEstimate(
            flops=int(n_rows) * num_bars * 30,
            transcendentals=int(n_rows) * (num_bars + 1),
            bytes_accessed=int(nf * 128 * in_itemsize + nf * fold * 8 + 4096))

        loss_fold = pl.pallas_call(
            kernel,
            out_shape=jax.ShapeDtypeStruct((nf, fold), jnp.float32),
            grid_spec=pltpu.PrefetchScalarGridSpec(
                num_scalar_prefetch=0,
                grid=grid,
                in_specs=[
                    pl.BlockSpec((tm, 128), lambda i: (i, 0)),
                    pl.BlockSpec((tm, fold), lambda i: (i, 0)),
                    pl.BlockSpec((3, 128), lambda i: (0, 0)),
                    pl.BlockSpec((fold, 128), lambda i: (0, 0)),
                    pl.BlockSpec((128, fold), lambda i: (0, 0)),
                ],
                out_specs=pl.BlockSpec((tm, fold), lambda i: (i, 0)),
            ),
            compiler_params=pltpu.CompilerParams(
                dimension_semantics=("parallel",),
                vmem_limit_bytes=int(vmem_limit)),
            cost_estimate=cost,
        )(logits_fold, idx_fold, consts, bexp, bsum)

        loss_flat = jnp.reshape(loss_fold, (nf * fold,))[:n_rows]
        return jnp.reshape(loss_flat, lead_shape)

    # ------------------ fallback: NB does not divide 128 -------------------
    log_bw2d = jnp.reshape(log_bw, (1, num_bars))
    idx2d = jnp.reshape(idx_f, (n_rows, 1))

    rt_auto, vmem_limit = _pick_flat_tile(num_bars, n_rows)
    rt = rt_auto if row_tile is None else min(int(row_tile), n_rows)
    grid = (pl.cdiv(n_rows, rt),)
    kernel = functools.partial(_bar_loss_flat_kernel,
                               num_bars=num_bars, smoothing=eff_s)
    cost = pl.CostEstimate(
        flops=int(n_rows) * num_bars * 12,
        transcendentals=int(n_rows) * (num_bars + 1),
        bytes_accessed=int(n_rows * num_bars * in_itemsize + n_rows * 8 + 4096))

    loss1d = pl.pallas_call(
        kernel,
        out_shape=jax.ShapeDtypeStruct((n_rows,), jnp.float32),
        grid_spec=pltpu.PrefetchScalarGridSpec(
            num_scalar_prefetch=0,
            grid=grid,
            in_specs=[
                pl.BlockSpec((rt, num_bars), lambda i: (i, 0)),
                pl.BlockSpec((rt, 1), lambda i: (i, 0)),
                pl.BlockSpec((1, num_bars), lambda i: (0, 0)),
            ],
            out_specs=pl.BlockSpec((rt,), lambda i: (i,)),
        ),
        compiler_params=pltpu.CompilerParams(
            dimension_semantics=("parallel",),
            vmem_limit_bytes=int(vmem_limit)),
        cost_estimate=cost,
    )(logits2d, idx2d, log_bw2d)

    return jnp.reshape(loss1d, lead_shape)


# ---------------------------------------------------------------------------
# Pure-JAX reference mirroring the PyTorch forward
# ---------------------------------------------------------------------------
def _reference_forward(logits, y, borders, smoothing, training):
    num_bars = borders.shape[0] - 1
    y = jnp.reshape(y, logits.shape[:-1]).astype(jnp.float32)
    ignore = jnp.isnan(y)
    y = jnp.where(ignore, borders[0], y)
    idx = jnp.searchsorted(borders, y, side="left").astype(jnp.int32) - 1
    idx = jnp.where(y == borders[0], 0, idx)
    idx = jnp.where(y == borders[-1], num_bars - 1, idx)
    idx = jnp.clip(idx, 0, num_bars - 1)
    log_probs = jax.nn.log_softmax(logits.astype(jnp.float32), axis=-1)
    scaled = log_probs - jnp.log(borders[1:] - borders[:-1])
    nll = -jnp.take_along_axis(scaled, idx[..., None], axis=-1)[..., 0]
    smooth = -jnp.mean(scaled, axis=-1)
    s = smoothing if training else 0.0
    loss = (1.0 - s) * nll + s * smooth
    return jnp.where(ignore, 0.0, loss)


if __name__ == "__main__":
    def _run_case(seed, seq, batch, num_bars, smoothing, dtype, row_tile=None):
        k1, k2 = jax.random.split(jax.random.PRNGKey(seed))
        borders = jnp.linspace(-2.0, 2.0, num_bars + 1, dtype=jnp.float32)
        logits = jax.random.normal(k1, (seq, batch, num_bars),
                                   dtype=jnp.float32).astype(dtype)
        y = jnp.clip(jax.random.normal(k2, (seq, batch), dtype=jnp.float32),
                     -1.9, 1.9)
        # exercise the nan / exact-border edge paths
        y = y.at[0, 0].set(jnp.nan)
        y = y.at[1, batch - 1].set(borders[0])
        y = y.at[2, 0].set(borders[-1])

        loss = bar_distribution_forward(logits, y, borders,
                                        smoothing=smoothing, training=True,
                                        row_tile=row_tile)
        loss = jax.block_until_ready(loss)
        ref = _reference_forward(logits, y, borders, smoothing, True)
        assert loss.shape == (seq, batch), (loss.shape, (seq, batch))
        assert bool(jnp.allclose(loss, ref, atol=1e-5, rtol=1e-5)), (loss, ref)

    # 1) folded path, exact fold (N % F == 0), f32 wire
    _run_case(0, seq=8, batch=2, num_bars=16, smoothing=0.1, dtype=jnp.float32)
    # 2) folded path with row padding, multi-block ragged grid, bf16 wire
    _run_case(1, seq=33, batch=4, num_bars=16, smoothing=0.05,
              dtype=jnp.bfloat16, row_tile=8)
    # 3) fallback lane layout (num_bars does not divide 128)
    _run_case(2, seq=8, batch=2, num_bars=20, smoothing=0.1, dtype=jnp.float32)

    print("KERNEL_OK")
</pallas_src>

<mosaic_0001>
module attributes {stable_mosaic.version = 11 : i64} {
  func.func @_bar_loss_folded_kernel(%arg0: i32, %arg1: memref<2x128xf32, #tpu.memory_space<vmem>>, %arg2: memref<2x8xf32, #tpu.memory_space<vmem>>, %arg3: memref<3x128xf32, #tpu.memory_space<vmem>>, %arg4: memref<8x128xbf16, #tpu.memory_space<vmem>>, %arg5: memref<128x8xbf16, #tpu.memory_space<vmem>>, %arg6: memref<2x8xf32, #tpu.memory_space<vmem>>) attributes {dimension_semantics = [#tpu.dimension_semantics<parallel>], iteration_bounds = array<i64: 1>, scalar_prefetch = 0 : i64, scratch_operands = 0 : i64, tpu.core_type = #tpu.core_type<tc>, window_params = [{transform_indices = @transform_0, window_bounds = array<i64: 2, 128>}, {transform_indices = @transform_1, window_bounds = array<i64: 2, 8>}, {pipeline_mode = #tpu.pipeline_mode<synchronous>, transform_indices = @transform_2, window_bounds = array<i64: 3, 128>}, {pipeline_mode = #tpu.pipeline_mode<synchronous>, transform_indices = @transform_3, window_bounds = array<i64: 8, 128>}, {pipeline_mode = #tpu.pipeline_mode<synchronous>, transform_indices = @transform_4, window_bounds = array<i64: 128, 8>}, {transform_indices = @transform_5, window_bounds = array<i64: 2, 8>}]} {
    %c0 = arith.constant 0 : index
    %c0_0 = arith.constant 0 : index
    %0 = vector.load %arg1[%c0, %c0_0] : memref<2x128xf32, #tpu.memory_space<vmem>>, vector<2x128xf32>
    %c0_1 = arith.constant 0 : index
    %c0_2 = arith.constant 0 : index
    %1 = vector.load %arg2[%c0_1, %c0_2] : memref<2x8xf32, #tpu.memory_space<vmem>>, vector<2x8xf32>
    %c0_3 = arith.constant 0 : index
    %c0_4 = arith.constant 0 : index
    %2 = vector.load %arg3[%c0_3, %c0_4] : memref<3x128xf32, #tpu.memory_space<vmem>>, vector<3x128xf32>
    %3 = vector.extract_strided_slice %2 {offsets = [0, 0], sizes = [1, 128], strides = [1, 1]} : vector<3x128xf32> to vector<1x128xf32>
    %4 = vector.extract_strided_slice %2 {offsets = [1, 0], sizes = [1, 128], strides = [1, 1]} : vector<3x128xf32> to vector<1x128xf32>
    %5 = vector.extract_strided_slice %2 {offsets = [2, 0], sizes = [1, 128], strides = [1, 1]} : vector<3x128xf32> to vector<1x128xf32>
    %c0_5 = arith.constant 0 : index
    %c0_6 = arith.constant 0 : index
    %6 = vector.load %arg4[%c0_5, %c0_6] : memref<8x128xbf16, #tpu.memory_space<vmem>>, vector<8x128xbf16>
    %c0_7 = arith.constant 0 : index
    %c0_8 = arith.constant 0 : index
    %7 = vector.load %arg5[%c0_7, %c0_8] : memref<128x8xbf16, #tpu.memory_space<vmem>>, vector<128x8xbf16>
    %cst = arith.constant dense<0xFF800000> : vector<2xf32>
    %8 = vector.multi_reduction <maximumf>, %0, %cst [1] : vector<2x128xf32> to vector<2xf32>
    %9 = vector.shape_cast %8 : vector<2xf32> to vector<2x1xf32>
    %10 = vector.broadcast %9 : vector<2x1xf32> to vector<2x128xf32>
    %11 = arith.subf %0, %10 : vector<2x128xf32>
    %12 = math.exp %11 : vector<2x128xf32>
    %13 = arith.truncf %12 : vector<2x128xf32> to vector<2x128xbf16>
    %cst_9 = arith.constant dense<0.000000e+00> : vector<2x8xf32>
    %14 = tpu.matmul %13, %7, %cst_9 {dimension_numbers = #tpu.dot_dimension_numbers<[1], [0], [0], [1], [0, 0, 1, 1], [], []>} : vector<2x128xbf16>, vector<128x8xbf16>, vector<2x8xf32> -> vector<2x8xf32>
    %15 = arith.extf %13 : vector<2x128xbf16> to vector<2x128xf32>
    %16 = arith.subf %12, %15 : vector<2x128xf32>
    %17 = arith.truncf %16 : vector<2x128xf32> to vector<2x128xbf16>
    %cst_10 = arith.constant dense<0.000000e+00> : vector<2x8xf32>
    %18 = tpu.matmul %17, %7, %cst_10 {dimension_numbers = #tpu.dot_dimension_numbers<[1], [0], [0], [1], [0, 0, 1, 1], [], []>} : vector<2x128xbf16>, vector<128x8xbf16>, vector<2x8xf32> -> vector<2x8xf32>
    %19 = arith.addf %14, %18 : vector<2x8xf32>
    %20 = arith.extf %17 : vector<2x128xbf16> to vector<2x128xf32>
    %21 = arith.subf %16, %20 : vector<2x128xf32>
    %22 = arith.truncf %21 : vector<2x128xf32> to vector<2x128xbf16>
    %cst_11 = arith.constant dense<0.000000e+00> : vector<2x8xf32>
    %23 = tpu.matmul %22, %7, %cst_11 {dimension_numbers = #tpu.dot_dimension_numbers<[1], [0], [0], [1], [0, 0, 1, 1], [], []>} : vector<2x128xbf16>, vector<128x8xbf16>, vector<2x8xf32> -> vector<2x8xf32>
    %24 = arith.addf %19, %23 : vector<2x8xf32>
    %25 = arith.truncf %1 : vector<2x8xf32> to vector<2x8xbf16>
    %cst_12 = arith.constant dense<0.000000e+00> : vector<2x128xf32>
    %26 = tpu.matmul %25, %6, %cst_12 {dimension_numbers = #tpu.dot_dimension_numbers<[1], [0], [0], [1], [0, 0, 1, 1], [], []>} : vector<2x8xbf16>, vector<8x128xbf16>, vector<2x128xf32> -> vector<2x128xf32>
    %27 = vector.broadcast %3 : vector<1x128xf32> to vector<2x128xf32>
    %28 = arith.cmpf oeq, %26, %27 : vector<2x128xf32>
    %29 = vector.broadcast %4 : vector<1x128xf32> to vector<2x128xf32>
    %30 = arith.subf %29, %0 : vector<2x128xf32>
    %cst_13 = arith.constant 0.000000e+00 : f32
    %31 = vector.broadcast %cst_13 : f32 to vector<2x128xf32>
    %32 = arith.select %28, %30, %31 : vector<2x128xi1>, vector<2x128xf32>
    %cst_14 = arith.constant 0.899999976 : f32
    %33 = vector.broadcast %cst_14 : f32 to vector<2x128xf32>
    %34 = arith.mulf %33, %32 : vector<2x128xf32>
    %cst_15 = arith.constant 6.250000e-03 : f32
    %35 = vector.broadcast %cst_15 : f32 to vector<2x128xf32>
    %36 = arith.mulf %35, %0 : vector<2x128xf32>
    %37 = arith.subf %34, %36 : vector<2x128xf32>
    %38 = vector.broadcast %5 : vector<1x128xf32> to vector<2x128xf32>
    %39 = arith.addf %37, %38 : vector<2x128xf32>
    %40 = arith.truncf %39 : vector<2x128xf32> to vector<2x128xbf16>
    %cst_16 = arith.constant dense<0.000000e+00> : vector<2x8xf32>
    %41 = tpu.matmul %40, %7, %cst_16 {dimension_numbers = #tpu.dot_dimension_numbers<[1], [0], [0], [1], [0, 0, 1, 1], [], []>} : vector<2x128xbf16>, vector<128x8xbf16>, vector<2x8xf32> -> vector<2x8xf32>
    %42 = arith.extf %40 : vector<2x128xbf16> to vector<2x128xf32>
    %43 = arith.subf %39, %42 : vector<2x128xf32>
    %44 = arith.truncf %43 : vector<2x128xf32> to vector<2x128xbf16>
    %cst_17 = arith.constant dense<0.000000e+00> : vector<2x8xf32>
    %45 = tpu.matmul %44, %7, %cst_17 {dimension_numbers = #tpu.dot_dimension_numbers<[1], [0], [0], [1], [0, 0, 1, 1], [], []>} : vector<2x128xbf16>, vector<128x8xbf16>, vector<2x8xf32> -> vector<2x8xf32>
    %46 = arith.addf %41, %45 : vector<2x8xf32>
    %47 = arith.extf %44 : vector<2x128xbf16> to vector<2x128xf32>
    %48 = arith.subf %43, %47 : vector<2x128xf32>
    %49 = arith.truncf %48 : vector<2x128xf32> to vector<2x128xbf16>
    %cst_18 = arith.constant dense<0.000000e+00> : vector<2x8xf32>
    %50 = tpu.matmul %49, %7, %cst_18 {dimension_numbers = #tpu.dot_dimension_numbers<[1], [0], [0], [1], [0, 0, 1, 1], [], []>} : vector<2x128xbf16>, vector<128x8xbf16>, vector<2x8xf32> -> vector<2x8xf32>
    %51 = arith.addf %46, %50 : vector<2x8xf32>
    %52 = math.log %24 : vector<2x8xf32>
    %53 = vector.broadcast %9 : vector<2x1xf32> to vector<2x8xf32>
    %54 = arith.addf %53, %52 : vector<2x8xf32>
    %55 = arith.addf %54, %51 : vector<2x8xf32>
    %cst_19 = arith.constant 0.000000e+00 : f32
    %56 = vector.broadcast %cst_19 : f32 to vector<2x8xf32>
    %57 = arith.cmpf olt, %1, %56 : vector<2x8xf32>
    %cst_20 = arith.constant 0.000000e+00 : f32
    %58 = vector.broadcast %cst_20 : f32 to vector<2x8xf32>
    %59 = arith.select %57, %58, %55 : vector<2x8xi1>, vector<2x8xf32>
    %c0_21 = arith.constant 0 : index
    %c0_22 = arith.constant 0 : index
    %60 = vector.load %arg6[%c0_21, %c0_22] : memref<2x8xf32, #tpu.memory_space<vmem>>, vector<2x8xf32>
    tpu.vector_store %arg6[%c0_21, %c0_22], %59 {strides = array<i32>} : memref<2x8xf32, #tpu.memory_space<vmem>>, vector<2x8xf32>,
    return
  }
  func.func @transform_0(%arg0: i32) -> (i32, i32) {
    %c0_i32 = arith.constant 0 : i32
    %c0_i32_0 = arith.constant 0 : i32
    return %arg0, %c0_i32 : i32, i32
  }
  func.func @transform_1(%arg0: i32) -> (i32, i32) {
    %c0_i32 = arith.constant 0 : i32
    %c0_i32_0 = arith.constant 0 : i32
    return %arg0, %c0_i32 : i32, i32
  }
  func.func @transform_2(%arg0: i32) -> (i32, i32) {
    %c0_i32 = arith.constant 0 : i32
    %c0_i32_0 = arith.constant 0 : i32
    %c0_i32_1 = arith.constant 0 : i32
    return %c0_i32, %c0_i32_0 : i32, i32
  }
  func.func @transform_3(%arg0: i32) -> (i32, i32) {
    %c0_i32 = arith.constant 0 : i32
    %c0_i32_0 = arith.constant 0 : i32
    %c0_i32_1 = arith.constant 0 : i32
    return %c0_i32, %c0_i32_0 : i32, i32
  }
  func.func @transform_4(%arg0: i32) -> (i32, i32) {
    %c0_i32 = arith.constant 0 : i32
    %c0_i32_0 = arith.constant 0 : i32
    %c0_i32_1 = arith.constant 0 : i32
    return %c0_i32, %c0_i32_0 : i32, i32
  }
  func.func @transform_5(%arg0: i32) -> (i32, i32) {
    %c0_i32 = arith.constant 0 : i32
    %c0_i32_0 = arith.constant 0 : i32
    return %arg0, %c0_i32 : i32, i32
  }
}

</mosaic_0001>

<llo_original>
// kernel: tpu_custom_call.1
$region0: #{tpu_custom_call.1}
  #allocation0 [shape = 'u32[]', space=smem, size = 0x4, offset = 0x4, fixed_abs, tag = 'smem constant byte address 0x4 - core index']
  #allocation1 [shape = 'u32[144,128]{1,0:T(1,128)}', space=vmem, size = 0x12000, scoped, tag = 'internal scratch']
  %s0 = inlined_call_operand.vmem [shape: f32[2,128], index: 0, kind: input, shape index: {}]
  %s1 = inlined_call_operand.vmem [shape: f32[2,8], index: 1, kind: input, shape index: {}]
  %s2 = inlined_call_operand.vmem [shape: f32[3,128], index: 2, kind: input, shape index: {}]
  %s3 = inlined_call_operand.vmem [shape: bf16[8,128], index: 3, kind: input, shape index: {}]
  %s4 = inlined_call_operand.vmem [shape: bf16[128,8], index: 4, kind: input, shape index: {}]
  %s5 = inlined_call_operand.hbm [shape: f32[2,8], index: 5, kind: output, shape index: {}]
  %s6 = sld [smem:[#allocation0]]
  $region30: #{tpu_custom_call.1} parent=0
    _
  %s8 = ssub.s32 1, %s6
  %s9 = scalar_select 0, %s8, %s6
  $region1: #{tpu_custom_call.1} parent=0
    #allocation2 [shape = 'u8[1024]{0}', space=vmem, size = 0x400, scoped, tag = 'output window, operand 0, single buffered']
    #allocation3 [shape = 's32[1]{0}', space=sflag, size = 0x4, scoped, tag = 'scoped memory for tpu_custom_call.1']
    %10 = vsyncpa [#allocation3], 0
    // Predicated region
    $region2: #{tpu_custom_call.1} parent=1 // pred_check
      _
    $region3: #{tpu_custom_call.1} parent=1 // pred_check_branch
      %12 = sbr.rel (0) target = $region5
    $region4: #{tpu_custom_call.1} parent=1 // pred_region
      _
    $region5: #{tpu_custom_call.1} parent=1 // pred_fallthru
      _
    // Predicated region
    $region6: #{tpu_custom_call.1} parent=1 // pred_check
      _
    $region7: #{tpu_custom_call.1} parent=1 // pred_check_branch
      %14 = sbr.rel (0) target = $region9
    $region8: #{tpu_custom_call.1} parent=1 // pred_region
      _
    $region9: #{tpu_custom_call.1} parent=1 // pred_fallthru
      _
    // Predicated region
    $region10: #{tpu_custom_call.1} parent=1 // pred_check
      _
    $region11: #{tpu_custom_call.1} parent=1 // pred_check_branch
      %16 = sbr.rel (0) target = $region13
    $region12: #{tpu_custom_call.1} parent=1 // pred_region
      _
    $region13: #{tpu_custom_call.1} parent=1 // pred_fallthru
      _
    // Predicated region
    $region14: #{tpu_custom_call.1} parent=1 // pred_check
      _
    $region15: #{tpu_custom_call.1} parent=1 // pred_check_branch
      %18 = sbr.rel (0) target = $region17
    $region16: #{tpu_custom_call.1} parent=1 // pred_region
      _
    $region17: #{tpu_custom_call.1} parent=1 // pred_fallthru
      _
    // Predicated region
    $region18: #{tpu_custom_call.1} parent=1 // pred_check
      _
    $region19: #{tpu_custom_call.1} parent=1 // pred_check_branch
      %20 = sbr.rel (0) target = $region21
    $region20: #{tpu_custom_call.1} parent=1 // pred_region
      _
    $region21: #{tpu_custom_call.1} parent=1 // pred_fallthru
      _
    %v22 = vld [vmem:[%s0] sm:$0x3]
    %v23 = vld [vmem:[%s1] sm:$0x3]
    %v24 = vld [vmem:[%s2] sm:$0x7]
    %v25 = vld [vmem:[%s3] sm:$0xf]
    %v26 = vld [vmem:[%s4] sm:$0xf]
    %v27 = vld [vmem:[%s4 + $0x4] sm:$0xf]
    %v28 = vld [vmem:[%s4 + $0x8] sm:$0xf]
    %v29 = vld [vmem:[%s4 + $0xc] sm:$0xf]
    %v30 = vld [vmem:[%s4 + $0x10] sm:$0xf]
    %v31 = vld [vmem:[%s4 + $0x14] sm:$0xf]
    %v32 = vld [vmem:[%s4 + $0x18] sm:$0xf]
    %v33 = vld [vmem:[%s4 + $0x1c] sm:$0xf]
    %v34 = vld [vmem:[%s4 + $0x20] sm:$0xf]
    %v35 = vld [vmem:[%s4 + $0x24] sm:$0xf]
    %v36 = vld [vmem:[%s4 + $0x28] sm:$0xf]
    %v37 = vld [vmem:[%s4 + $0x2c] sm:$0xf]
    %v38 = vld [vmem:[%s4 + $0x30] sm:$0xf]
    %v39 = vld [vmem:[%s4 + $0x34] sm:$0xf]
    %v40 = vld [vmem:[%s4 + $0x38] sm:$0xf]
    %v41 = vld [vmem:[%s4 + $0x3c] sm:$0xf]
    %vm42 = vcmask 1041408
    %v43 = vsel %vm42, %v22, -inf
    %44 = vmax.xlane.f32.xlu0 %v43
    %v45 = vpop.xlane.xlu0 %44
    %v46 = vsub.f32 %v22, %v45
    %v47 = vmul.f32 %v46, 1.442695
    %v48 = vpow.pop %v47
    %v49 = vpack.c.bf16 %v48, %v48
    %v50 = vunpack.c.l.bf16 %v49
    %v51 = vsub.f32 %v48, %v50
    %v52 = vpack.c.bf16 %v51, %v51
    %v69 = vunpack.c.l.b16 %v26
    %v70 = vunpack.c.l.b16 %v27
    %v71 = vunpack.c.l.b16 %v28
    %v72 = vunpack.c.l.b16 %v29
    %v73 = vunpack.c.l.b16 %v30
    %v74 = vunpack.c.l.b16 %v31
    %v75 = vunpack.c.l.b16 %v32
    %v76 = vunpack.c.l.b16 %v33
    %v77 = vunpack.c.l.b16 %v34
    %v78 = vunpack.c.l.b16 %v35
    %v79 = vunpack.c.l.b16 %v36
    %v80 = vunpack.c.l.b16 %v37
    %v81 = vunpack.c.l.b16 %v38
    %v82 = vunpack.c.l.b16 %v39
    %v83 = vunpack.c.l.b16 %v40
    %v84 = vunpack.c.l.b16 %v41
    %v85 = vpack.c.b16 %v70, %v69
    %v86 = vpack.c.b16 %v72, %v71
    %v87 = vpack.c.b16 %v74, %v73
    %v88 = vpack.c.b16 %v76, %v75
    %v89 = vpack.c.b16 %v78, %v77
    %v90 = vpack.c.b16 %v80, %v79
    %v91 = vpack.c.b16 %v82, %v81
    %v92 = vpack.c.b16 %v84, %v83
    %101 = vmatprep.subr.bf16.mxu0 0
    %102 = vmatpush1.bf16.msra.mxu0 %v85
    %103 = vmatprep.subr.bf16.mxu0 0
    %104 = vmatpush1.bf16.msra.mxu0 %v86
    %105 = vmatprep.subr.bf16.mxu0 0
    %106 = vmatpush1.bf16.msra.mxu0 %v87
    %107 = vmatprep.subr.bf16.mxu0 0
    %108 = vmatpush1.bf16.msra.mxu0 %v88
    %109 = vmatprep.subr.bf16.mxu0 0
    %110 = vmatpush1.bf16.msra.mxu0 %v89
    %111 = vmatprep.subr.bf16.mxu0 0
    %112 = vmatpush1.bf16.msra.mxu0 %v90
    %113 = vmatprep.subr.bf16.mxu0 0
    %114 = vmatpush1.bf16.msra.mxu0 %v91
    %115 = vmatprep.subr.bf16.mxu0 0
    %116 = vmatpush1.bf16.msra.mxu0 %v92
    %117 = vmatprep.subr.bf16.mxu0 0
    %118 = vmatpush1.bf16.msra.mxu0 0
    %119 = vmatprep.subr.bf16.mxu0 0
    %120 = vmatpush1.bf16.msra.mxu0 0
    %121 = vmatprep.subr.bf16.mxu0 0
    %122 = vmatpush1.bf16.msra.mxu0 0
    %123 = vmatprep.subr.bf16.mxu0 0
    %124 = vmatpush1.bf16.msra.mxu0 0
    %125 = vmatprep.subr.bf16.mxu0 0
    %126 = vmatpush1.bf16.msra.mxu0 0
    %127 = vmatprep.subr.bf16.mxu0 0
    %128 = vmatpush1.bf16.msra.mxu0 0
    %129 = vmatprep.subr.bf16.mxu0 0
    %130 = vmatpush1.bf16.msra.mxu0 0
    %131 = vmatprep.subr.bf16.mxu0 0
    %132 = vmatpush1.bf16.msra.mxu0 0
    %133 = vmatprep.mubr.bf16.mxu0 0
    %134 = vmatmul.mubr.bf16.gmra.mrb[0].mxu0 %v52
    %v135 = vpop.f32.mrb[0].mxu0
    %v136 = vadd.f32 0.0, %v135
    %v137 = vpop.f32.mrb[0].mxu0
    %v138 = vpop.f32.mrb[0].mxu0
    %v139 = vpop.f32.mrb[0].mxu0
    %140 = vdwg.mxu0
    %141 = vmatprep.subr.bf16.mxu0 0
    %142 = vmatpush1.bf16.msra.mxu0 %v85
    %143 = vmatprep.subr.bf16.mxu0 0
    %144 = vmatpush1.bf16.msra.mxu0 %v86
    %145 = vmatprep.subr.bf16.mxu0 0
    %146 = vmatpush1.bf16.msra.mxu0 %v87
    %147 = vmatprep.subr.bf16.mxu0 0
    %148 = vmatpush1.bf16.msra.mxu0 %v88
    %149 = vmatprep.subr.bf16.mxu0 0
    %150 = vmatpush1.bf16.msra.mxu0 %v89
    %151 = vmatprep.subr.bf16.mxu0 0
    %152 = vmatpush1.bf16.msra.mxu0 %v90
    %153 = vmatprep.subr.bf16.mxu0 0
    %154 = vmatpush1.bf16.msra.mxu0 %v91
    %155 = vmatprep.subr.bf16.mxu0 0
    %156 = vmatpush1.bf16.msra.mxu0 %v92
    %157 = vmatprep.subr.bf16.mxu0 0
    %158 = vmatpush1.bf16.msra.mxu0 0
    %159 = vmatprep.subr.bf16.mxu0 0
    %160 = vmatpush1.bf16.msra.mxu0 0
    %161 = vmatprep.subr.bf16.mxu0 0
    %162 = vmatpush1.bf16.msra.mxu0 0
    %163 = vmatprep.subr.bf16.mxu0 0
    %164 = vmatpush1.bf16.msra.mxu0 0
    %165 = vmatprep.subr.bf16.mxu0 0
    %166 = vmatpush1.bf16.msra.mxu0 0
    %167 = vmatprep.subr.bf16.mxu0 0
    %168 = vmatpush1.bf16.msra.mxu0 0
    %169 = vmatprep.subr.bf16.mxu0 0
    %170 = vmatpush1.bf16.msra.mxu0 0
    %171 = vmatprep.subr.bf16.mxu0 0
    %172 = vmatpush1.bf16.msra.mxu0 0
    %173 = vmatprep.mubr.bf16.mxu0 0
    %174 = vmatmul.mubr.bf16.gmra.mrb[0].mxu0 %v49
    %v175 = vpop.f32.mrb[0].mxu0
    %v176 = vadd.f32 %v136, %v175
    %v177 = vpop.f32.mrb[0].mxu0
    %v178 = vpop.f32.mrb[0].mxu0
    %v179 = vpop.f32.mrb[0].mxu0
    %180 = vdwg.mxu0
    %v181 = vunpack.c.l.bf16 %v52
    %v182 = vsub.f32 %v51, %v181
    %v183 = vpack.c.bf16 %v182, %v182
    %184 = vmatprep.subr.bf16.mxu0 0
    %185 = vmatpush1.bf16.msra.mxu0 %v85
    %186 = vmatprep.subr.bf16.mxu0 0
    %187 = vmatpush1.bf16.msra.mxu0 %v86
    %188 = vmatprep.subr.bf16.mxu0 0
    %189 = vmatpush1.bf16.msra.mxu0 %v87
    %190 = vmatprep.subr.bf16.mxu0 0
    %191 = vmatpush1.bf16.msra.mxu0 %v88
    %192 = vmatprep.subr.bf16.mxu0 0
    %193 = vmatpush1.bf16.msra.mxu0 %v89
    %194 = vmatprep.subr.bf16.mxu0 0
    %195 = vmatpush1.bf16.msra.mxu0 %v90
    %196 = vmatprep.subr.bf16.mxu0 0
    %197 = vmatpush1.bf16.msra.mxu0 %v91
    %198 = vmatprep.subr.bf16.mxu0 0
    %199 = vmatpush1.bf16.msra.mxu0 %v92
    %200 = vmatprep.subr.bf16.mxu0 0
    %201 = vmatpush1.bf16.msra.mxu0 0
    %202 = vmatprep.subr.bf16.mxu0 0
    %203 = vmatpush1.bf16.msra.mxu0 0
    %204 = vmatprep.subr.bf16.mxu0 0
    %205 = vmatpush1.bf16.msra.mxu0 0
    %206 = vmatprep.subr.bf16.mxu0 0
    %207 = vmatpush1.bf16.msra.mxu0 0
    %208 = vmatprep.subr.bf16.mxu0 0
    %209 = vmatpush1.bf16.msra.mxu0 0
    %210 = vmatprep.subr.bf16.mxu0 0
    %211 = vmatpush1.bf16.msra.mxu0 0
    %212 = vmatprep.subr.bf16.mxu0 0
    %213 = vmatpush1.bf16.msra.mxu0 0
    %214 = vmatprep.subr.bf16.mxu0 0
    %215 = vmatpush1.bf16.msra.mxu0 0
    %216 = vmatprep.mubr.bf16.mxu0 0
    %217 = vmatmul.mubr.bf16.gmra.mrb[0].mxu0 %v183
    %v218 = vpop.f32.mrb[0].mxu0
    %v219 = vadd.f32 0.0, %v218
    %v220 = vpop.f32.mrb[0].mxu0
    %v221 = vpop.f32.mrb[0].mxu0
    %v222 = vpop.f32.mrb[0].mxu0
    %223 = vdwg.mxu0
    %v224 = vadd.f32 %v176, %v219
    %v225 = vpack.c.bf16 %v23, %v23
    %vm226 = vcmask 64512
    %v228 = vsel %vm226, %v225, 0
    %vm230 = vcmask 1043456
    %v232 = vsel %vm230, %v25, 0
    %234 = vmatprep.subr.bf16.mxu0 0
    %235 = vmatpush1.bf16.msra.mxu0 %v232
    %236 = vmatprep.subr.bf16.mxu0 0
    %237 = vmatpush1.bf16.msra.mxu0 0
    %238 = vmatprep.subr.bf16.mxu0 0
    %239 = vmatpush1.bf16.msra.mxu0 0
    %240 = vmatprep.subr.bf16.mxu0 0
    %241 = vmatpush1.bf16.msra.mxu0 0
    %242 = vmatprep.subr.bf16.mxu0 0
    %243 = vmatpush1.bf16.msra.mxu0 0
    %244 = vmatprep.subr.bf16.mxu0 0
    %245 = vmatpush1.bf16.msra.mxu0 0
    %246 = vmatprep.subr.bf16.mxu0 0
    %247 = vmatpush1.bf16.msra.mxu0 0
    %248 = vmatprep.subr.bf16.mxu0 0
    %249 = vmatpush1.bf16.msra.mxu0 0
    %250 = vmatprep.subr.bf16.mxu0 0
    %251 = vmatpush1.bf16.msra.mxu0 0
    %252 = vmatprep.subr.bf16.mxu0 0
    %253 = vmatpush1.bf16.msra.mxu0 0
    %254 = vmatprep.subr.bf16.mxu0 0
    %255 = vmatpush1.bf16.msra.mxu0 0
    %256 = vmatprep.subr.bf16.mxu0 0
    %257 = vmatpush1.bf16.msra.mxu0 0
    %258 = vmatprep.subr.bf16.mxu0 0
    %259 = vmatpush1.bf16.msra.mxu0 0
    %260 = vmatprep.subr.bf16.mxu0 0
    %261 = vmatpush1.bf16.msra.mxu0 0
    %262 = vmatprep.subr.bf16.mxu0 0
    %263 = vmatpush1.bf16.msra.mxu0 0
    %264 = vmatprep.subr.bf16.mxu0 0
    %265 = vmatpush1.bf16.msra.mxu0 0
    %266 = vmatprep.mubr.bf16.mxu0 0
    %267 = vmatmul.mubr.bf16.gmra.mrb[0].mxu0 %v228
    %v268 = vpop.f32.mrb[0].mxu0
    %v269 = vadd.f32 0.0, %v268
    %v270 = vpop.f32.mrb[0].mxu0
    %v271 = vpop.f32.mrb[0].mxu0
    %v272 = vpop.f32.mrb[0].mxu0
    %273 = vdwg.mxu0
    %v274 = vlaneseq
    %v275 = vshrl.u32 %v274, 7
    %v276 = vsub.s32 0, %v275
    %v277 = vrot.slane %v24, %v276
    %vm278 = vcmp.eq.f32.partialorder %v269, %v277
    %v279 = vlaneseq
    %v280 = vshrl.u32 %v279, 7
    %v281 = vsub.s32 1, %v280
    %v282 = vrot.slane %v24, %v281
    %v283 = vsub.f32 %v282, %v22
    %v284 = vsel %vm278, %v283, 0.0
    %v285 = vmul.f32 %v284, 0.9
    %v286 = vmul.f32 %v22, 0.00625
    %v287 = vsub.f32 %v285, %v286
    %v288 = vlaneseq
    %v289 = vshrl.u32 %v288, 7
    %v290 = vsub.s32 2, %v289
    %v291 = vrot.slane %v24, %v290
    %v292 = vadd.f32 %v287, %v291
    %v293 = vpack.c.bf16 %v292, %v292
    %v294 = vunpack.c.l.bf16 %v293
    %v295 = vsub.f32 %v292, %v294
    %v296 = vpack.c.bf16 %v295, %v295
    %297 = vmatprep.subr.bf16.mxu0 0
    %298 = vmatpush1.bf16.msra.mxu0 %v85
    %299 = vmatprep.subr.bf16.mxu0 0
    %300 = vmatpush1.bf16.msra.mxu0 %v86
    %301 = vmatprep.subr.bf16.mxu0 0
    %302 = vmatpush1.bf16.msra.mxu0 %v87
    %303 = vmatprep.subr.bf16.mxu0 0
    %304 = vmatpush1.bf16.msra.mxu0 %v88
    %305 = vmatprep.subr.bf16.mxu0 0
    %306 = vmatpush1.bf16.msra.mxu0 %v89
    %307 = vmatprep.subr.bf16.mxu0 0
    %308 = vmatpush1.bf16.msra.mxu0 %v90
    %309 = vmatprep.subr.bf16.mxu0 0
    %310 = vmatpush1.bf16.msra.mxu0 %v91
    %311 = vmatprep.subr.bf16.mxu0 0
    %312 = vmatpush1.bf16.msra.mxu0 %v92
    %313 = vmatprep.subr.bf16.mxu0 0
    %314 = vmatpush1.bf16.msra.mxu0 0
    %315 = vmatprep.subr.bf16.mxu0 0
    %316 = vmatpush1.bf16.msra.mxu0 0
    %317 = vmatprep.subr.bf16.mxu0 0
    %318 = vmatpush1.bf16.msra.mxu0 0
    %319 = vmatprep.subr.bf16.mxu0 0
    %320 = vmatpush1.bf16.msra.mxu0 0
    %321 = vmatprep.subr.bf16.mxu0 0
    %322 = vmatpush1.bf16.msra.mxu0 0
    %323 = vmatprep.subr.bf16.mxu0 0
    %324 = vmatpush1.bf16.msra.mxu0 0
    %325 = vmatprep.subr.bf16.mxu0 0
    %326 = vmatpush1.bf16.msra.mxu0 0
    %327 = vmatprep.subr.bf16.mxu0 0
    %328 = vmatpush1.bf16.msra.mxu0 0
    %329 = vmatprep.mubr.bf16.mxu0 0
    %330 = vmatmul.mubr.bf16.gmra.mrb[0].mxu0 %v296
    %v331 = vpop.f32.mrb[0].mxu0
    %v332 = vadd.f32 0.0, %v331
    %v333 = vpop.f32.mrb[0].mxu0
    %v334 = vpop.f32.mrb[0].mxu0
    %v335 = vpop.f32.mrb[0].mxu0
    %336 = vdwg.mxu0
    %337 = vmatprep.subr.bf16.mxu0 0
    %338 = vmatpush1.bf16.msra.mxu0 %v85
    %339 = vmatprep.subr.bf16.mxu0 0
    %340 = vmatpush1.bf16.msra.mxu0 %v86
    %341 = vmatprep.subr.bf16.mxu0 0
    %342 = vmatpush1.bf16.msra.mxu0 %v87
    %343 = vmatprep.subr.bf16.mxu0 0
    %344 = vmatpush1.bf16.msra.mxu0 %v88
    %345 = vmatprep.subr.bf16.mxu0 0
    %346 = vmatpush1.bf16.msra.mxu0 %v89
    %347 = vmatprep.subr.bf16.mxu0 0
    %348 = vmatpush1.bf16.msra.mxu0 %v90
    %349 = vmatprep.subr.bf16.mxu0 0
    %350 = vmatpush1.bf16.msra.mxu0 %v91
    %351 = vmatprep.subr.bf16.mxu0 0
    %352 = vmatpush1.bf16.msra.mxu0 %v92
    %353 = vmatprep.subr.bf16.mxu0 0
    %354 = vmatpush1.bf16.msra.mxu0 0
    %355 = vmatprep.subr.bf16.mxu0 0
    %356 = vmatpush1.bf16.msra.mxu0 0
    %357 = vmatprep.subr.bf16.mxu0 0
    %358 = vmatpush1.bf16.msra.mxu0 0
    %359 = vmatprep.subr.bf16.mxu0 0
    %360 = vmatpush1.bf16.msra.mxu0 0
    %361 = vmatprep.subr.bf16.mxu0 0
    %362 = vmatpush1.bf16.msra.mxu0 0
    %363 = vmatprep.subr.bf16.mxu0 0
    %364 = vmatpush1.bf16.msra.mxu0 0
    %365 = vmatprep.subr.bf16.mxu0 0
    %366 = vmatpush1.bf16.msra.mxu0 0
    %367 = vmatprep.subr.bf16.mxu0 0
    %368 = vmatpush1.bf16.msra.mxu0 0
    %369 = vmatprep.mubr.bf16.mxu0 0
    %370 = vmatmul.mubr.bf16.gmra.mrb[0].mxu0 %v293
    %v371 = vpop.f32.mrb[0].mxu0
    %v372 = vadd.f32 %v332, %v371
    %v373 = vpop.f32.mrb[0].mxu0
    %v374 = vpop.f32.mrb[0].mxu0
    %v375 = vpop.f32.mrb[0].mxu0
    %376 = vdwg.mxu0
    %v377 = vunpack.c.l.bf16 %v296
    %v378 = vsub.f32 %v295, %v377
    %v379 = vpack.c.bf16 %v378, %v378
    %380 = vmatprep.subr.bf16.mxu0 0
    %381 = vmatpush1.bf16.msra.mxu0 %v85
    %382 = vmatprep.subr.bf16.mxu0 0
    %383 = vmatpush1.bf16.msra.mxu0 %v86
    %384 = vmatprep.subr.bf16.mxu0 0
    %385 = vmatpush1.bf16.msra.mxu0 %v87
    %386 = vmatprep.subr.bf16.mxu0 0
    %387 = vmatpush1.bf16.msra.mxu0 %v88
    %388 = vmatprep.subr.bf16.mxu0 0
    %389 = vmatpush1.bf16.msra.mxu0 %v89
    %390 = vmatprep.subr.bf16.mxu0 0
    %391 = vmatpush1.bf16.msra.mxu0 %v90
    %392 = vmatprep.subr.bf16.mxu0 0
    %393 = vmatpush1.bf16.msra.mxu0 %v91
    %394 = vmatprep.subr.bf16.mxu0 0
    %395 = vmatpush1.bf16.msra.mxu0 %v92
    %396 = vmatprep.subr.bf16.mxu0 0
    %397 = vmatpush1.bf16.msra.mxu0 0
    %398 = vmatprep.subr.bf16.mxu0 0
    %399 = vmatpush1.bf16.msra.mxu0 0
    %400 = vmatprep.subr.bf16.mxu0 0
    %401 = vmatpush1.bf16.msra.mxu0 0
    %402 = vmatprep.subr.bf16.mxu0 0
    %403 = vmatpush1.bf16.msra.mxu0 0
    %404 = vmatprep.subr.bf16.mxu0 0
    %405 = vmatpush1.bf16.msra.mxu0 0
    %406 = vmatprep.subr.bf16.mxu0 0
    %407 = vmatpush1.bf16.msra.mxu0 0
    %408 = vmatprep.subr.bf16.mxu0 0
    %409 = vmatpush1.bf16.msra.mxu0 0
    %410 = vmatprep.subr.bf16.mxu0 0
    %411 = vmatpush1.bf16.msra.mxu0 0
    %412 = vmatprep.mubr.bf16.mxu0 0
    %413 = vmatmul.mubr.bf16.gmra.mrb[0].mxu0 %v379
    %v414 = vpop.f32.mrb[0].mxu0
    %v415 = vadd.f32 0.0, %v414
    %v416 = vpop.f32.mrb[0].mxu0
    %v417 = vpop.f32.mrb[0].mxu0
    %v418 = vpop.f32.mrb[0].mxu0
    %419 = vdwg.mxu0
    %v420 = vadd.f32 %v372, %v415
    %v421 = vlog2.pop %v224
    %v422 = vmul.f32 %v421, 0.6931472
    %v423 = vadd.f32 %v45, %v422
    %v424 = vadd.f32 %v423, %v420
    %vm425 = vcmp.lt.f32.partialorder %v23, 0.0
    %v426 = vsel %vm425, 0.0, %v424
    %vm427 = vcmask 58368
    %428 = vst.msk [vmem:[#allocation2] sm:$0x3] %vm427, %v426
    // Predicated region
    $region22: #{tpu_custom_call.1} parent=1 // pred_check
      _
    $region23: #{tpu_custom_call.1} parent=1 // pred_check_branch
      %430 = sbr.rel (0) target = $region25
    $region24: #{tpu_custom_call.1} parent=1 // pred_region
      %s432 = ssub.s32 32, 32
      %433 = vsyncadd [#allocation3], %s432
      %s435 = sshll.u32 [#allocation2], 4
      %s436 = int_to_ptr.vmem [resolvable:$true] %s435
      %438 = dma.vmem_to_hbm [thread:$0]  %s436, 32, %s5, [#allocation3]
    $region25: #{tpu_custom_call.1} parent=1 // pred_fallthru
      _
    // Predicated region
    $region26: #{tpu_custom_call.1} parent=1 // pred_check
      _
    $region27: #{tpu_custom_call.1} parent=1 // pred_check_branch
      %440 = sbr.rel (0) target = $region29
    $region28: #{tpu_custom_call.1} parent=1 // pred_region
      %441 = dma.done [#allocation3], 32
    $region29: #{tpu_custom_call.1} parent=1 // pred_fallthru
      _
    %442 = vsyncpa [#allocation3], 1

</llo_original>
